<compile_context>
chip_gen: v6e
topology: v6e:2x2x1
jax: 0.10.0
libtpu: 0.0.40
codegen_flags: <defaults>
</compile_context>

<pallas_src>
import math

import jax
import jax.numpy as jnp
from jax.experimental import pallas as pl
from jax.experimental.pallas import tpu as pltpu


def _round_up(v, m):
    return (v + m - 1) // m * m


def _layer_sizes(stat_len, num_of_classes, num_of_layers):
    """Mirrors the size schedule in Model_team_N_layer.__init__."""
    sizes = []
    last = stat_len
    for i in range(1, num_of_layers):
        size = round((stat_len - num_of_classes) / num_of_layers
                     * (num_of_layers - i)) + num_of_classes
        sizes.append((last, size))
        last = size
    sizes.append((last, num_of_classes))
    return sizes


def _make_mlp_kernel(num_layers):
    """Fused MLP kernel: x -> [tanh (f32) -> bf16 matmul (f32 acc) + bias] * L."""
    def kernel(*refs):
        x_ref = refs[0]
        o_ref = refs[-1]
        h = x_ref[...].astype(jnp.float32)
        for i in range(num_layers):
            w = refs[1 + 2 * i][...]           # (in_p, out_p) bf16
            b = refs[2 + 2 * i][...]           # (1, out_p)    f32
            a = jnp.tanh(h).astype(jnp.bfloat16)
            h = jnp.dot(a, w, preferred_element_type=jnp.float32) + b
        o_ref[...] = h.astype(o_ref.dtype)
    return kernel


def pallas_team_mlp(x, weights, biases, *, batch_tile=256):
    """Runs the whole tanh->linear stack inside one Pallas kernel.

    x:        (B, stat_len) float32
    weights:  list of (in_i, out_i) float32 arrays (already transposed vs.
              torch.nn.Linear, i.e. kernel computes h @ W + b)
    biases:   list of (out_i,) float32 arrays
    """
    B, in_dim = x.shape
    num_layers = len(weights)
    out_dims = [w.shape[1] for w in weights]
    # Feature dims as seen by the kernel: input unpadded, every layer output
    # lane-padded to a multiple of 128 (unmasked vst, MXU-friendly N).
    pdims = [in_dim] + [_round_up(d, 128) for d in out_dims]

    # Batch tiling: big tiles (>=256 rows) amortize per-step pipeline cost and
    # fill the MXU M dimension; clamp for tiny batches.
    bt = _round_up(min(batch_tile, _round_up(B, 8)), 8)
    Bp = _round_up(B, bt)
    if Bp != B:
        # Row padding only (no lane padding). tanh(0)=0 keeps padded rows
        # harmless; they are sliced off at the end.
        x = jnp.zeros((Bp, in_dim), x.dtype).at[:B].set(x)

    args = [x]
    in_specs = [pl.BlockSpec((bt, in_dim), lambda i: (i, 0))]
    for li, (w, b) in enumerate(zip(weights, biases)):
        din, dout = w.shape
        # Zero-padding is exact: padded weight rows/cols and bias lanes are
        # zero, so padded lanes stay identically zero through every layer.
        wp = jnp.zeros((pdims[li], pdims[li + 1]), jnp.bfloat16)
        wp = wp.at[:din, :dout].set(w.astype(jnp.bfloat16))
        bp = jnp.zeros((1, pdims[li + 1]), jnp.float32).at[0, :dout].set(b)
        args += [wp, bp]
        in_specs += [
            pl.BlockSpec((pdims[li], pdims[li + 1]), lambda i: (0, 0)),
            pl.BlockSpec((1, pdims[li + 1]), lambda i: (0, 0)),
        ]

    out_spec = pl.BlockSpec((bt, pdims[-1]), lambda i: (i, 0))

    out = pl.pallas_call(
        _make_mlp_kernel(num_layers),
        out_shape=jax.ShapeDtypeStruct((Bp, pdims[-1]), jnp.float32),
        grid=(Bp // bt,),
        in_specs=in_specs,
        out_specs=out_spec,
        compiler_params=pltpu.CompilerParams(
            dimension_semantics=("parallel",)),
    )(*args)
    return out[:B, :out_dims[-1]]


def _init_params(key, stat_len, num_of_classes, num_of_layers):
    """Deterministic torch.nn.Linear-style init (uniform(+-1/sqrt(fan_in)))."""
    sizes = _layer_sizes(stat_len, num_of_classes, num_of_layers)
    weights, biases = [], []
    for (fan_in, fan_out) in sizes:
        key, kw, kb = jax.random.split(key, 3)
        bound = 1.0 / math.sqrt(fan_in)
        w = jax.random.uniform(kw, (fan_in, fan_out), jnp.float32,
                               minval=-bound, maxval=bound)
        b = jax.random.uniform(kb, (fan_out,), jnp.float32,
                               minval=-bound, maxval=bound)
        weights.append(w)
        biases.append(b)
    return weights, biases


def _reference_forward_f32(x, weights, biases):
    h = x
    for w, b in zip(weights, biases):
        h = jnp.tanh(h)
        h = h @ w + b
    return h


def _reference_forward_bf16(x, weights, biases):
    """Mirrors the kernel's precision choices (bf16 matmul, f32 accumulate)."""
    h = x.astype(jnp.float32)
    for w, b in zip(weights, biases):
        a = jnp.tanh(h).astype(jnp.bfloat16)
        h = jnp.dot(a, w.astype(jnp.bfloat16),
                    preferred_element_type=jnp.float32) + b
    return h


if __name__ == "__main__":
    # Module config: team stats, no embedding.
    stat_len = 32          # input feature width
    num_of_classes = 4
    number_of_layers = 3
    batch = 512            # 2 grid steps of 256 rows -> exercises megacore

    key = jax.random.PRNGKey(0)
    key, kx = jax.random.split(key)
    x = jax.random.normal(kx, (batch, stat_len), jnp.float32)

    weights, biases = _init_params(key, stat_len, num_of_classes,
                                   number_of_layers)

    out = pallas_team_mlp(x, weights, biases)
    out = jax.block_until_ready(out)

    assert out.shape == (batch, num_of_classes), out.shape

    ref_bf16 = _reference_forward_bf16(x, weights, biases)
    assert jnp.allclose(out, ref_bf16, atol=1e-2, rtol=1e-2), (
        float(jnp.max(jnp.abs(out - ref_bf16))))

    # Loose sanity check against the full-f32 math of the torch module.
    ref_f32 = _reference_forward_f32(x, weights, biases)
    assert jnp.allclose(out, ref_f32, atol=5e-2, rtol=5e-2), (
        float(jnp.max(jnp.abs(out - ref_f32))))

    print("KERNEL_OK")
</pallas_src>

<mosaic_0001>
module attributes {stable_mosaic.version = 11 : i64} {
  func.func @kernel(%arg0: i32, %arg1: memref<256x32xf32, #tpu.memory_space<vmem>>, %arg2: memref<32x128xbf16, #tpu.memory_space<vmem>>, %arg3: memref<1x128xf32, #tpu.memory_space<vmem>>, %arg4: memref<128x128xbf16, #tpu.memory_space<vmem>>, %arg5: memref<1x128xf32, #tpu.memory_space<vmem>>, %arg6: memref<128x128xbf16, #tpu.memory_space<vmem>>, %arg7: memref<1x128xf32, #tpu.memory_space<vmem>>, %arg8: memref<256x128xf32, #tpu.memory_space<vmem>>) attributes {dimension_semantics = [#tpu.dimension_semantics<parallel>], iteration_bounds = array<i64: 2>, scalar_prefetch = 0 : i64, scratch_operands = 0 : i64, tpu.core_type = #tpu.core_type<tc>, window_params = [{transform_indices = @transform_0, window_bounds = array<i64: 256, 32>}, {pipeline_mode = #tpu.pipeline_mode<synchronous>, transform_indices = @transform_1, window_bounds = array<i64: 32, 128>}, {pipeline_mode = #tpu.pipeline_mode<synchronous>, transform_indices = @transform_2, window_bounds = array<i64: 1, 128>}, {pipeline_mode = #tpu.pipeline_mode<synchronous>, transform_indices = @transform_3, window_bounds = array<i64: 128, 128>}, {pipeline_mode = #tpu.pipeline_mode<synchronous>, transform_indices = @transform_4, window_bounds = array<i64: 1, 128>}, {pipeline_mode = #tpu.pipeline_mode<synchronous>, transform_indices = @transform_5, window_bounds = array<i64: 128, 128>}, {pipeline_mode = #tpu.pipeline_mode<synchronous>, transform_indices = @transform_6, window_bounds = array<i64: 1, 128>}, {transform_indices = @transform_7, window_bounds = array<i64: 256, 128>}]} {
    %c0 = arith.constant 0 : index
    %c0_0 = arith.constant 0 : index
    %0 = vector.load %arg1[%c0, %c0_0] : memref<256x32xf32, #tpu.memory_space<vmem>>, vector<256x32xf32>
    %c0_1 = arith.constant 0 : index
    %c0_2 = arith.constant 0 : index
    %1 = vector.load %arg2[%c0_1, %c0_2] : memref<32x128xbf16, #tpu.memory_space<vmem>>, vector<32x128xbf16>
    %c0_3 = arith.constant 0 : index
    %c0_4 = arith.constant 0 : index
    %2 = vector.load %arg3[%c0_3, %c0_4] : memref<1x128xf32, #tpu.memory_space<vmem>>, vector<1x128xf32>
    %3 = math.tanh %0 : vector<256x32xf32>
    %4 = arith.truncf %3 : vector<256x32xf32> to vector<256x32xbf16>
    %cst = arith.constant dense<0.000000e+00> : vector<256x128xf32>
    %5 = tpu.matmul %4, %1, %cst {dimension_numbers = #tpu.dot_dimension_numbers<[1], [0], [0], [1], [0, 0, 1, 1], [], []>} : vector<256x32xbf16>, vector<32x128xbf16>, vector<256x128xf32> -> vector<256x128xf32>
    %6 = vector.broadcast %2 : vector<1x128xf32> to vector<256x128xf32>
    %7 = arith.addf %5, %6 : vector<256x128xf32>
    %c0_5 = arith.constant 0 : index
    %c0_6 = arith.constant 0 : index
    %8 = vector.load %arg4[%c0_5, %c0_6] : memref<128x128xbf16, #tpu.memory_space<vmem>>, vector<128x128xbf16>
    %c0_7 = arith.constant 0 : index
    %c0_8 = arith.constant 0 : index
    %9 = vector.load %arg5[%c0_7, %c0_8] : memref<1x128xf32, #tpu.memory_space<vmem>>, vector<1x128xf32>
    %10 = math.tanh %7 : vector<256x128xf32>
    %11 = arith.truncf %10 : vector<256x128xf32> to vector<256x128xbf16>
    %cst_9 = arith.constant dense<0.000000e+00> : vector<256x128xf32>
    %12 = tpu.matmul %11, %8, %cst_9 {dimension_numbers = #tpu.dot_dimension_numbers<[1], [0], [0], [1], [0, 0, 1, 1], [], []>} : vector<256x128xbf16>, vector<128x128xbf16>, vector<256x128xf32> -> vector<256x128xf32>
    %13 = vector.broadcast %9 : vector<1x128xf32> to vector<256x128xf32>
    %14 = arith.addf %12, %13 : vector<256x128xf32>
    %c0_10 = arith.constant 0 : index
    %c0_11 = arith.constant 0 : index
    %15 = vector.load %arg6[%c0_10, %c0_11] : memref<128x128xbf16, #tpu.memory_space<vmem>>, vector<128x128xbf16>
    %c0_12 = arith.constant 0 : index
    %c0_13 = arith.constant 0 : index
    %16 = vector.load %arg7[%c0_12, %c0_13] : memref<1x128xf32, #tpu.memory_space<vmem>>, vector<1x128xf32>
    %17 = math.tanh %14 : vector<256x128xf32>
    %18 = arith.truncf %17 : vector<256x128xf32> to vector<256x128xbf16>
    %cst_14 = arith.constant dense<0.000000e+00> : vector<256x128xf32>
    %19 = tpu.matmul %18, %15, %cst_14 {dimension_numbers = #tpu.dot_dimension_numbers<[1], [0], [0], [1], [0, 0, 1, 1], [], []>} : vector<256x128xbf16>, vector<128x128xbf16>, vector<256x128xf32> -> vector<256x128xf32>
    %20 = vector.broadcast %16 : vector<1x128xf32> to vector<256x128xf32>
    %21 = arith.addf %19, %20 : vector<256x128xf32>
    %c0_15 = arith.constant 0 : index
    %c0_16 = arith.constant 0 : index
    %22 = vector.load %arg8[%c0_15, %c0_16] : memref<256x128xf32, #tpu.memory_space<vmem>>, vector<256x128xf32>
    tpu.vector_store %arg8[%c0_15, %c0_16], %21 {strides = array<i32>} : memref<256x128xf32, #tpu.memory_space<vmem>>, vector<256x128xf32>,
    return
  }
  func.func @transform_0(%arg0: i32) -> (i32, i32) {
    %c0_i32 = arith.constant 0 : i32
    %c0_i32_0 = arith.constant 0 : i32
    return %arg0, %c0_i32 : i32, i32
  }
  func.func @transform_1(%arg0: i32) -> (i32, i32) {
    %c0_i32 = arith.constant 0 : i32
    %c0_i32_0 = arith.constant 0 : i32
    %c0_i32_1 = arith.constant 0 : i32
    return %c0_i32, %c0_i32_0 : i32, i32
  }
  func.func @transform_2(%arg0: i32) -> (i32, i32) {
    %c0_i32 = arith.constant 0 : i32
    %c0_i32_0 = arith.constant 0 : i32
    %c0_i32_1 = arith.constant 0 : i32
    return %c0_i32, %c0_i32_0 : i32, i32
  }
  func.func @transform_3(%arg0: i32) -> (i32, i32) {
    %c0_i32 = arith.constant 0 : i32
    %c0_i32_0 = arith.constant 0 : i32
    %c0_i32_1 = arith.constant 0 : i32
    return %c0_i32, %c0_i32_0 : i32, i32
  }
  func.func @transform_4(%arg0: i32) -> (i32, i32) {
    %c0_i32 = arith.constant 0 : i32
    %c0_i32_0 = arith.constant 0 : i32
    %c0_i32_1 = arith.constant 0 : i32
    return %c0_i32, %c0_i32_0 : i32, i32
  }
  func.func @transform_5(%arg0: i32) -> (i32, i32) {
    %c0_i32 = arith.constant 0 : i32
    %c0_i32_0 = arith.constant 0 : i32
    %c0_i32_1 = arith.constant 0 : i32
    return %c0_i32, %c0_i32_0 : i32, i32
  }
  func.func @transform_6(%arg0: i32) -> (i32, i32) {
    %c0_i32 = arith.constant 0 : i32
    %c0_i32_0 = arith.constant 0 : i32
    %c0_i32_1 = arith.constant 0 : i32
    return %c0_i32, %c0_i32_0 : i32, i32
  }
  func.func @transform_7(%arg0: i32) -> (i32, i32) {
    %c0_i32 = arith.constant 0 : i32
    %c0_i32_0 = arith.constant 0 : i32
    return %arg0, %c0_i32 : i32, i32
  }
}

</mosaic_0001>

<llo_original>
// kernel: tpu_custom_call.1
$region0: #{tpu_custom_call.1}
  #allocation0 [shape = 'u32[]', space=smem, size = 0x4, offset = 0x4, fixed_abs, tag = 'smem constant byte address 0x4 - core index']
  #allocation1 [shape = 'u32[144,128]{1,0:T(1,128)}', space=vmem, size = 0x12000, scoped, tag = 'internal scratch']
  %s0 = inlined_call_operand.vmem [shape: f32[512,32], index: 0, kind: input, shape index: {}]
  %s1 = inlined_call_operand.vmem [shape: bf16[32,128], index: 1, kind: input, shape index: {}]
  %s2 = inlined_call_operand.vmem [shape: f32[1,128], index: 2, kind: input, shape index: {}]
  %s3 = inlined_call_operand.vmem [shape: bf16[128,128], index: 3, kind: input, shape index: {}]
  %s4 = inlined_call_operand.vmem [shape: f32[1,128], index: 4, kind: input, shape index: {}]
  %s5 = inlined_call_operand.vmem [shape: bf16[128,128], index: 5, kind: input, shape index: {}]
  %s6 = inlined_call_operand.vmem [shape: f32[1,128], index: 6, kind: input, shape index: {}]
  %s7 = inlined_call_operand.hbm [shape: f32[512,128], index: 7, kind: output, shape index: {}]
  %s8 = sld [smem:[#allocation0]]
  $region61: #{tpu_custom_call.1} parent=0
    _
  %s10 = ssub.s32 1, %s8
  %s11 = scalar_select 0, %s10, %s8
  $region1: #{tpu_custom_call.1} parent=0
    #allocation2 [shape = 'u8[262144]{0}', space=vmem, size = 0x40000, scoped, tag = 'output window, operand 0']
    #allocation3 [shape = 's32[2]{0}', space=sflag, size = 0x8, scoped, tag = 'scoped memory for tpu_custom_call.1']
    %12 = vsyncpa [#allocation3], 0
    %s13 = scalar_lea.sflag [#allocation3], 1
    %14 = vsyncpa %s13, 0
    loop: start=0, step=1, limit=4
    $region2: #{tpu_custom_call.1} parent=1 // loop_pre_header
      _
    $region3: #{tpu_custom_call.1} parent=1 // loop_header
      %s16 = sphi 0, %s20
      %p17 = scmp.ge.s32.totalorder %s16, 4
      %s26 = sphi 0, %s28
      %s29 = sphi 0, %s26
      %s30 = sphi 0, %s29
      %s46 = sphi 0, %s30
      %s50 = sphi 0, %s50
      %s52 = sphi 0, %s50
      %s53 = sphi 0, %s52
      %s67 = sphi 0, %s53
      %s71 = sphi 0, %s71
      %s73 = sphi 0, %s71
      %s74 = sphi 0, %s73
      %s88 = sphi 0, %s74
      %s92 = sphi 0, %s92
      %s94 = sphi 0, %s92
      %s95 = sphi 0, %s94
      %s109 = sphi 0, %s95
      %s113 = sphi 0, %s113
      %s115 = sphi 0, %s113
      %s116 = sphi 0, %s115
      %s130 = sphi 0, %s116
      %s134 = sphi 0, %s134
      %s136 = sphi 0, %s134
      %s137 = sphi 0, %s136
      %s151 = sphi 0, %s137
      %s155 = sphi 0, %s155
      %s157 = sphi 0, %s155
      %s158 = sphi 0, %s157
      %s172 = sphi 0, %s158
      %s178 = sphi 0, %s180
      %s181 = sphi 0, %s178
      %s182 = sphi 0, %s181
      %s198 = sphi 0, %s182
    $region4: #{tpu_custom_call.1} parent=1 // loop_header_branch
      %19 = sbr.rel (%p17) target = $region8
    $region5: #{tpu_custom_call.1} parent=1 // loop_body
      %s21 = ssub.s32 %s16, 1
      %s22 = ssub.s32 %s16, 2
      %s23 = sadd.s32 %s16, 1
      %s24 = ssub.s32 %s16, %s23
      %p25 = scmp.eq.s32.totalorder %s24, 0
      %s27 = sadd.s32 %s26, 1
      %s28 = scalar_select %p25, %s26, %s27
      %p31 = pneg %p25
      %p32 = scmp.eq.s32.totalorder %s16, 1
      %p33 = por %p31, %p32
      %p34 = scmp.ne.s32.totalorder %s26, %s29
      %p35 = scmp.eq.s32.totalorder %s16, 0
      %p36 = por %p34, %p35
      %p37 = scmp.ne.s32.totalorder %s26, %s29
      %p38 = scmp.eq.s32.totalorder %s21, 1
      %p39 = por %p37, %p38
      %p40 = scmp.ne.s32.totalorder %s29, %s30
      %p41 = scmp.eq.s32.totalorder %s21, 0
      %p42 = por %p40, %p41
      %p43 = scmp.ne.s32.totalorder %s29, %s30
      %p44 = scmp.eq.s32.totalorder %s22, 1
      %p45 = por %p43, %p44
      %p47 = scmp.ne.s32.totalorder %s30, %s46
      %p48 = scmp.eq.s32.totalorder %s22, 0
      %p49 = por %p47, %p48
      %s51 = sadd.s32 %s50, 1
      %p54 = scmp.eq.s32.totalorder %s16, 1
      %p55 = scmp.ne.s32.totalorder %s50, %s52
      %p56 = scmp.eq.s32.totalorder %s16, 0
      %p57 = por %p55, %p56
      %p58 = scmp.ne.s32.totalorder %s50, %s52
      %p59 = scmp.eq.s32.totalorder %s21, 1
      %p60 = por %p58, %p59
      %p61 = scmp.ne.s32.totalorder %s52, %s53
      %p62 = scmp.eq.s32.totalorder %s21, 0
      %p63 = por %p61, %p62
      %p64 = scmp.ne.s32.totalorder %s52, %s53
      %p65 = scmp.eq.s32.totalorder %s22, 1
      %p66 = por %p64, %p65
      %p68 = scmp.ne.s32.totalorder %s53, %s67
      %p69 = scmp.eq.s32.totalorder %s22, 0
      %p70 = por %p68, %p69
      %s72 = sadd.s32 %s71, 1
      %p75 = scmp.eq.s32.totalorder %s16, 1
      %p76 = scmp.ne.s32.totalorder %s71, %s73
      %p77 = scmp.eq.s32.totalorder %s16, 0
      %p78 = por %p76, %p77
      %p79 = scmp.ne.s32.totalorder %s71, %s73
      %p80 = scmp.eq.s32.totalorder %s21, 1
      %p81 = por %p79, %p80
      %p82 = scmp.ne.s32.totalorder %s73, %s74
      %p83 = scmp.eq.s32.totalorder %s21, 0
      %p84 = por %p82, %p83
      %p85 = scmp.ne.s32.totalorder %s73, %s74
      %p86 = scmp.eq.s32.totalorder %s22, 1
      %p87 = por %p85, %p86
      %p89 = scmp.ne.s32.totalorder %s74, %s88
      %p90 = scmp.eq.s32.totalorder %s22, 0
      %p91 = por %p89, %p90
      %s93 = sadd.s32 %s92, 1
      %p96 = scmp.eq.s32.totalorder %s16, 1
      %p97 = scmp.ne.s32.totalorder %s92, %s94
      %p98 = scmp.eq.s32.totalorder %s16, 0
      %p99 = por %p97, %p98
      %p100 = scmp.ne.s32.totalorder %s92, %s94
      %p101 = scmp.eq.s32.totalorder %s21, 1
      %p102 = por %p100, %p101
      %p103 = scmp.ne.s32.totalorder %s94, %s95
      %p104 = scmp.eq.s32.totalorder %s21, 0
      %p105 = por %p103, %p104
      %p106 = scmp.ne.s32.totalorder %s94, %s95
      %p107 = scmp.eq.s32.totalorder %s22, 1
      %p108 = por %p106, %p107
      %p110 = scmp.ne.s32.totalorder %s95, %s109
      %p111 = scmp.eq.s32.totalorder %s22, 0
      %p112 = por %p110, %p111
      %s114 = sadd.s32 %s113, 1
      %p117 = scmp.eq.s32.totalorder %s16, 1
      %p118 = scmp.ne.s32.totalorder %s113, %s115
      %p119 = scmp.eq.s32.totalorder %s16, 0
      %p120 = por %p118, %p119
      %p121 = scmp.ne.s32.totalorder %s113, %s115
      %p122 = scmp.eq.s32.totalorder %s21, 1
      %p123 = por %p121, %p122
      %p124 = scmp.ne.s32.totalorder %s115, %s116
      %p125 = scmp.eq.s32.totalorder %s21, 0
      %p126 = por %p124, %p125
      %p127 = scmp.ne.s32.totalorder %s115, %s116
      %p128 = scmp.eq.s32.totalorder %s22, 1
      %p129 = por %p127, %p128
      %p131 = scmp.ne.s32.totalorder %s116, %s130
      %p132 = scmp.eq.s32.totalorder %s22, 0
      %p133 = por %p131, %p132
      %s135 = sadd.s32 %s134, 1
      %p138 = scmp.eq.s32.totalorder %s16, 1
      %p139 = scmp.ne.s32.totalorder %s134, %s136
      %p140 = scmp.eq.s32.totalorder %s16, 0
      %p141 = por %p139, %p140
      %p142 = scmp.ne.s32.totalorder %s134, %s136
      %p143 = scmp.eq.s32.totalorder %s21, 1
      %p144 = por %p142, %p143
      %p145 = scmp.ne.s32.totalorder %s136, %s137
      %p146 = scmp.eq.s32.totalorder %s21, 0
      %p147 = por %p145, %p146
      %p148 = scmp.ne.s32.totalorder %s136, %s137
      %p149 = scmp.eq.s32.totalorder %s22, 1
      %p150 = por %p148, %p149
      %p152 = scmp.ne.s32.totalorder %s137, %s151
      %p153 = scmp.eq.s32.totalorder %s22, 0
      %p154 = por %p152, %p153
      %s156 = sadd.s32 %s155, 1
      %p159 = scmp.eq.s32.totalorder %s16, 1
      %p160 = scmp.ne.s32.totalorder %s155, %s157
      %p161 = scmp.eq.s32.totalorder %s16, 0
      %p162 = por %p160, %p161
      %p163 = scmp.ne.s32.totalorder %s155, %s157
      %p164 = scmp.eq.s32.totalorder %s21, 1
      %p165 = por %p163, %p164
      %p166 = scmp.ne.s32.totalorder %s157, %s158
      %p167 = scmp.eq.s32.totalorder %s21, 0
      %p168 = por %p166, %p167
      %p169 = scmp.ne.s32.totalorder %s157, %s158
      %p170 = scmp.eq.s32.totalorder %s22, 1
      %p171 = por %p169, %p170
      %p173 = scmp.ne.s32.totalorder %s158, %s172
      %p174 = scmp.eq.s32.totalorder %s22, 0
      %p175 = por %p173, %p174
      %s176 = ssub.s32 %s16, %s23
      %p177 = scmp.eq.s32.totalorder %s176, 0
      %s179 = sadd.s32 %s178, 1
      %s180 = scalar_select %p177, %s178, %s179
      %p183 = pneg %p177
      %p184 = scmp.eq.s32.totalorder %s16, 1
      %p185 = por %p183, %p184
      %p186 = scmp.ne.s32.totalorder %s178, %s181
      %p187 = scmp.eq.s32.totalorder %s16, 0
      %p188 = por %p186, %p187
      %p189 = scmp.ne.s32.totalorder %s178, %s181
      %p190 = scmp.eq.s32.totalorder %s21, 1
      %p191 = por %p189, %p190
      %p192 = scmp.ne.s32.totalorder %s181, %s182
      %p193 = scmp.eq.s32.totalorder %s21, 0
      %p194 = por %p192, %p193
      %p195 = scmp.ne.s32.totalorder %s181, %s182
      %p196 = scmp.eq.s32.totalorder %s22, 1
      %p197 = por %p195, %p196
      %p199 = scmp.ne.s32.totalorder %s182, %s198
      %p200 = scmp.eq.s32.totalorder %s22, 0
      %p201 = por %p199, %p200
      %p202 = scmp.le.s32.totalorder 1, %s16
      %p203 = scmp.lt.s32.totalorder %s16, 3
      %p204 = pnand %p202, %p203
      %p205 = pneg %p204
      // Predicated region
      $region9: #{tpu_custom_call.1} parent=5 // pred_check
        _
      $region10: #{tpu_custom_call.1} parent=5 // pred_check_branch
        %207 = sbr.rel (%p204) target = $region12
      $region11: #{tpu_custom_call.1} parent=5 // pred_region
        %s208 = ssub.s32 %s16, 1
        // Predicated region
        $region13: #{tpu_custom_call.1} parent=11 // pred_check
          %p209 = pneg %p63
        $region14: #{tpu_custom_call.1} parent=11 // pred_check_branch
          %211 = sbr.rel (%p209) target = $region16
        $region15: #{tpu_custom_call.1} parent=11 // pred_region
          _
        $region16: #{tpu_custom_call.1} parent=11 // pred_fallthru
          _
        // Predicated region
        $region17: #{tpu_custom_call.1} parent=11 // pred_check
          %p212 = pneg %p84
        $region18: #{tpu_custom_call.1} parent=11 // pred_check_branch
          %214 = sbr.rel (%p212) target = $region20
        $region19: #{tpu_custom_call.1} parent=11 // pred_region
          _
        $region20: #{tpu_custom_call.1} parent=11 // pred_fallthru
          _
        // Predicated region
        $region21: #{tpu_custom_call.1} parent=11 // pred_check
          %p215 = pneg %p105
        $region22: #{tpu_custom_call.1} parent=11 // pred_check_branch
          %217 = sbr.rel (%p215) target = $region24
        $region23: #{tpu_custom_call.1} parent=11 // pred_region
          _
        $region24: #{tpu_custom_call.1} parent=11 // pred_fallthru
          _
        // Predicated region
        $region25: #{tpu_custom_call.1} parent=11 // pred_check
          %p218 = pneg %p126
        $region26: #{tpu_custom_call.1} parent=11 // pred_check_branch
          %220 = sbr.rel (%p218) target = $region28
        $region27: #{tpu_custom_call.1} parent=11 // pred_region
          _
        $region28: #{tpu_custom_call.1} parent=11 // pred_fallthru
          _
        // Predicated region
        $region29: #{tpu_custom_call.1} parent=11 // pred_check
          %p221 = pneg %p147
        $region30: #{tpu_custom_call.1} parent=11 // pred_check_branch
          %223 = sbr.rel (%p221) target = $region32
        $region31: #{tpu_custom_call.1} parent=11 // pred_region
          _
        $region32: #{tpu_custom_call.1} parent=11 // pred_fallthru
          _
        // Predicated region
        $region33: #{tpu_custom_call.1} parent=11 // pred_check
          %p224 = pneg %p168
        $region34: #{tpu_custom_call.1} parent=11 // pred_check_branch
          %226 = sbr.rel (%p224) target = $region36
        $region35: #{tpu_custom_call.1} parent=11 // pred_region
          _
        $region36: #{tpu_custom_call.1} parent=11 // pred_fallthru
          _
      $region12: #{tpu_custom_call.1} parent=5 // pred_fallthru
        _
      %p227 = scmp.lt.s32.totalorder %s16, 2
      // Predicated region
      $region37: #{tpu_custom_call.1} parent=5 // pred_check
        %p228 = pneg %p227
      $region38: #{tpu_custom_call.1} parent=5 // pred_check_branch
        %230 = sbr.rel (%p228) target = $region40
      $region39: #{tpu_custom_call.1} parent=5 // pred_region
        // Predicated region
        $region41: #{tpu_custom_call.1} parent=39 // pred_check
          %p231 = pneg %p36
        $region42: #{tpu_custom_call.1} parent=39 // pred_check_branch
          %233 = sbr.rel (%p231) target = $region44
        $region43: #{tpu_custom_call.1} parent=39 // pred_region
          %s234 = smul.u32 32, %s16
          %p235 = scmp.lt.s32.totalorder %s234, 63
          %s236 = scalar_select %p235, %s234, 63
          %s237 = smul.addr %s236, 8
          %s238 = scalar_lea.vmem %s0, %s237
          %s239 = smul.u32 32, %s16
        $region44: #{tpu_custom_call.1} parent=39 // pred_fallthru
          _
      $region40: #{tpu_custom_call.1} parent=5 // pred_fallthru
        _
      %p240 = scmp.le.s32.totalorder 1, %s16
      %p241 = scmp.lt.s32.totalorder %s16, 3
      %p242 = pnand %p240, %p241
      %p243 = pneg %p242
      // Predicated region
      $region45: #{tpu_custom_call.1} parent=5 // pred_check
        _
      $region46: #{tpu_custom_call.1} parent=5 // pred_check_branch
        %245 = sbr.rel (%p242) target = $region48
      $region47: #{tpu_custom_call.1} parent=5 // pred_region
        %s246 = ssub.s32 %s16, 1
        %s247 = smul.u32 32, %s21
        %p248 = scmp.lt.s32.totalorder %s247, 63
        %s249 = scalar_select %p248, %s247, 63
        %s250 = smul.addr %s249, 8
        %s251 = scalar_lea.vmem %s0, %s250
        %p252 = pneg %p42
        %p253 = pneg %p39
        %p254 = pneg %p63
        %p255 = pneg %p60
        %p256 = pneg %p84
        %p257 = pneg %p81
        %p258 = pneg %p105
        %p259 = pneg %p102
        %p260 = pneg %p126
        %p261 = pneg %p123
        %p262 = pneg %p147
        %p263 = pneg %p144
        %p264 = pneg %p168
        %p265 = pneg %p165
        %p266 = pneg %p194
        %p267 = pneg %p191
        %s268 = sand.u32 %s181, 1
        %s269 = scalar_lea.sflag [#allocation3], %s268
        %s270 = sand.u32 %s181, 1
        %s271 = smul.addr %s270, 256
        %s272 = scalar_lea.vmem [#allocation2], %s271
        %s273 = smul.u32 32, %s21
        %p274 = scmp.lt.s32.totalorder %s273, 63
        %s275 = scalar_select %p274, %s273, 63
        %s276 = smul.addr %s275, 8
        %s277 = scalar_lea.vmem %s0, %s276
        %s278 = smul.u32 32, %s21
        %s279 = smul.u32 32, %s21
        %v281 = vld [vmem:[%s277] sm:$0xff]
        %v282 = vld [vmem:[%s277 + $0x8] sm:$0xff]
        %v283 = vld [vmem:[%s277 + $0x10] sm:$0xff]
        %v284 = vld [vmem:[%s277 + $0x18] sm:$0xff]
        %v285 = vld [vmem:[%s277 + $0x20] sm:$0xff]
        %v286 = vld [vmem:[%s277 + $0x28] sm:$0xff]
        %v287 = vld [vmem:[%s277 + $0x30] sm:$0xff]
        %v288 = vld [vmem:[%s277 + $0x38] sm:$0xff]
        %v289 = vld [vmem:[%s277 + $0x40] sm:$0xff]
        %v290 = vld [vmem:[%s277 + $0x48] sm:$0xff]
        %v291 = vld [vmem:[%s277 + $0x50] sm:$0xff]
        %v292 = vld [vmem:[%s277 + $0x58] sm:$0xff]
        %v293 = vld [vmem:[%s277 + $0x60] sm:$0xff]
        %v294 = vld [vmem:[%s277 + $0x68] sm:$0xff]
        %v295 = vld [vmem:[%s277 + $0x70] sm:$0xff]
        %v296 = vld [vmem:[%s277 + $0x78] sm:$0xff]
        %v297 = vld [vmem:[%s277 + $0x80] sm:$0xff]
        %v298 = vld [vmem:[%s277 + $0x88] sm:$0xff]
        %v299 = vld [vmem:[%s277 + $0x90] sm:$0xff]
        %v300 = vld [vmem:[%s277 + $0x98] sm:$0xff]
        %v301 = vld [vmem:[%s277 + $0xa0] sm:$0xff]
        %v302 = vld [vmem:[%s277 + $0xa8] sm:$0xff]
        %v303 = vld [vmem:[%s277 + $0xb0] sm:$0xff]
        %v304 = vld [vmem:[%s277 + $0xb8] sm:$0xff]
        %v305 = vld [vmem:[%s277 + $0xc0] sm:$0xff]
        %v306 = vld [vmem:[%s277 + $0xc8] sm:$0xff]
        %v307 = vld [vmem:[%s277 + $0xd0] sm:$0xff]
        %v308 = vld [vmem:[%s277 + $0xd8] sm:$0xff]
        %v309 = vld [vmem:[%s277 + $0xe0] sm:$0xff]
        %v310 = vld [vmem:[%s277 + $0xe8] sm:$0xff]
        %v311 = vld [vmem:[%s277 + $0xf0] sm:$0xff]
        %v312 = vld [vmem:[%s277 + $0xf8] sm:$0xff]
        %v313 = vld [vmem:[%s1] sm:$0xf]
        %v314 = vld [vmem:[%s1 + $0x4] sm:$0xf]
        %v315 = vld [vmem:[%s1 + $0x8] sm:$0xf]
        %v316 = vld [vmem:[%s1 + $0xc] sm:$0xf]
        %v317 = vld [vmem:[%s2] sm:$0x1]
        %v318 = vtanh.pop %v281
        %v319 = vtanh.pop %v282
        %v320 = vtanh.pop %v283
        %v321 = vtanh.pop %v284
        %v322 = vtanh.pop %v285
        %v323 = vtanh.pop %v286
        %v324 = vtanh.pop %v287
        %v325 = vtanh.pop %v288
        %v326 = vtanh.pop %v289
        %v327 = vtanh.pop %v290
        %v328 = vtanh.pop %v291
        %v329 = vtanh.pop %v292
        %v330 = vtanh.pop %v293
        %v331 = vtanh.pop %v294
        %v332 = vtanh.pop %v295
        %v333 = vtanh.pop %v296
        %v334 = vtanh.pop %v297
        %v335 = vtanh.pop %v298
        %v336 = vtanh.pop %v299
        %v337 = vtanh.pop %v300
        %v338 = vtanh.pop %v301
        %v339 = vtanh.pop %v302
        %v340 = vtanh.pop %v303
        %v341 = vtanh.pop %v304
        %v342 = vtanh.pop %v305
        %v343 = vtanh.pop %v306
        %v344 = vtanh.pop %v307
        %v345 = vtanh.pop %v308
        %v346 = vtanh.pop %v309
        %v347 = vtanh.pop %v310
        %v348 = vtanh.pop %v311
        %v349 = vtanh.pop %v312
        %v350 = vpack.c.bf16 %v319, %v318
        %v351 = vpack.c.bf16 %v321, %v320
        %v352 = vpack.c.bf16 %v323, %v322
        %v353 = vpack.c.bf16 %v325, %v324
        %v354 = vpack.c.bf16 %v327, %v326
        %v355 = vpack.c.bf16 %v329, %v328
        %v356 = vpack.c.bf16 %v331, %v330
        %v357 = vpack.c.bf16 %v333, %v332
        %v358 = vpack.c.bf16 %v335, %v334
        %v359 = vpack.c.bf16 %v337, %v336
        %v360 = vpack.c.bf16 %v339, %v338
        %v361 = vpack.c.bf16 %v341, %v340
        %v362 = vpack.c.bf16 %v343, %v342
        %v363 = vpack.c.bf16 %v345, %v344
        %v364 = vpack.c.bf16 %v347, %v346
        %v365 = vpack.c.bf16 %v349, %v348
        %v367 = vlaneseq
        %v368 = vshrl.u32 %v367, 7
        %v369 = vsub.s32 0, %v368
        %v370 = vrot.slane %v317, %v369
        %v376 = vunpack.c.l.b16 %v313
        %v377 = vunpack.c.l.b16 %v314
        %v378 = vunpack.c.l.b16 %v315
        %v379 = vunpack.c.l.b16 %v316
        %v380 = vpack.c.b16 %v377, %v376
        %v381 = vpack.c.b16 %v379, %v378
        %vm384 = vcmask 261120
        %v386 = vsel %vm384, %v350, 0
        %v389 = vsel %vm384, %v351, 0
        %v392 = vsel %vm384, %v352, 0
        %v395 = vsel %vm384, %v353, 0
        %v398 = vsel %vm384, %v354, 0
        %v401 = vsel %vm384, %v355, 0
        %v404 = vsel %vm384, %v356, 0
        %v407 = vsel %vm384, %v357, 0
        %v410 = vsel %vm384, %v358, 0
        %v413 = vsel %vm384, %v359, 0
        %v416 = vsel %vm384, %v360, 0
        %v419 = vsel %vm384, %v361, 0
        %v422 = vsel %vm384, %v362, 0
        %v425 = vsel %vm384, %v363, 0
        %v428 = vsel %vm384, %v364, 0
        %v431 = vsel %vm384, %v365, 0
        %433 = vmatprep.subr.bf16.mxu0 0
        %434 = vmatpush1.bf16.msra.mxu0 0
        %435 = vmatprep.subr.bf16.mxu0 0
        %436 = vmatpush1.bf16.msra.mxu0 0
        %437 = vmatprep.subr.bf16.mxu0 0
        %438 = vmatpush1.bf16.msra.mxu0 0
        %439 = vmatprep.subr.bf16.mxu0 0
        %440 = vmatpush1.bf16.msra.mxu0 0
        %441 = vmatprep.subr.bf16.mxu0 0
        %442 = vmatpush1.bf16.msra.mxu0 0
        %443 = vmatprep.subr.bf16.mxu0 0
        %444 = vmatpush1.bf16.msra.mxu0 0
        %445 = vmatprep.subr.bf16.mxu0 0
        %446 = vmatpush1.bf16.msra.mxu0 %v381
        %447 = vmatprep.subr.bf16.mxu0 0
        %448 = vmatpush1.bf16.msra.mxu0 %v380
        %449 = vmatprep.subr.bf16.mxu0 0
        %450 = vmatpush2.bf16.msra.mxu0 0
        %451 = vmatprep.subr.bf16.mxu0 0
        %452 = vmatpush2.bf16.msra.mxu0 0
        %453 = vmatprep.subr.bf16.mxu0 0
        %454 = vmatpush2.bf16.msra.mxu0 0
        %455 = vmatprep.subr.bf16.mxu0 0
        %456 = vmatpush2.bf16.msra.mxu0 0
        %457 = vmatprep.subr.bf16.mxu0 0
        %458 = vmatpush2.bf16.msra.mxu0 0
        %459 = vmatprep.subr.bf16.mxu0 0
        %460 = vmatpush2.bf16.msra.mxu0 0
        %461 = vmatprep.subr.bf16.mxu0 0
        %462 = vmatpush2.bf16.msra.mxu0 0
        %463 = vmatprep.subr.bf16.mxu0 0
        %464 = vmatpush2.bf16.msra.mxu0 0
        %465 = vmatprep.mubr.bf16.mxu0 0
        %466 = vmatmul.mubr.bf16.gmra.mxu0 %v386
        %v467 = vpop.f32.mrf.mxu0
        %v468 = vadd.f32 %v370, %v467
        %v469 = vpop.f32.mrf.mxu0
        %v470 = vpop.f32.mrf.mxu0
        %v471 = vadd.f32 %v370, %v470
        %v472 = vpop.f32.mrf.mxu0
        %473 = vmatprep.mubr.bf16.mxu0 0
        %474 = vmatmul.mubr.bf16.gmra.mxu0 %v389
        %v475 = vpop.f32.mrf.mxu0
        %v476 = vadd.f32 %v370, %v475
        %v477 = vpop.f32.mrf.mxu0
        %v478 = vpop.f32.mrf.mxu0
        %v479 = vadd.f32 %v370, %v478
        %v480 = vpop.f32.mrf.mxu0
        %481 = vmatprep.mubr.bf16.mxu0 0
        %482 = vmatmul.mubr.bf16.gmra.mxu0 %v392
        %v483 = vpop.f32.mrf.mxu0
        %v484 = vadd.f32 %v370, %v483
        %v485 = vpop.f32.mrf.mxu0
        %v486 = vpop.f32.mrf.mxu0
        %v487 = vadd.f32 %v370, %v486
        %v488 = vpop.f32.mrf.mxu0
        %489 = vmatprep.mubr.bf16.mxu0 0
        %490 = vmatmul.mubr.bf16.gmra.mxu0 %v395
        %v491 = vpop.f32.mrf.mxu0
        %v492 = vadd.f32 %v370, %v491
        %v493 = vpop.f32.mrf.mxu0
        %v494 = vpop.f32.mrf.mxu0
        %v495 = vadd.f32 %v370, %v494
        %v496 = vpop.f32.mrf.mxu0
        %497 = vmatprep.mubr.bf16.mxu0 0
        %498 = vmatmul.mubr.bf16.gmra.mxu0 %v398
        %v499 = vpop.f32.mrf.mxu0
        %v500 = vadd.f32 %v370, %v499
        %v501 = vpop.f32.mrf.mxu0
        %v502 = vpop.f32.mrf.mxu0
        %v503 = vadd.f32 %v370, %v502
        %v504 = vpop.f32.mrf.mxu0
        %505 = vmatprep.mubr.bf16.mxu0 0
        %506 = vmatmul.mubr.bf16.gmra.mxu0 %v401
        %v507 = vpop.f32.mrf.mxu0
        %v508 = vadd.f32 %v370, %v507
        %v509 = vpop.f32.mrf.mxu0
        %v510 = vpop.f32.mrf.mxu0
        %v511 = vadd.f32 %v370, %v510
        %v512 = vpop.f32.mrf.mxu0
        %513 = vmatprep.mubr.bf16.mxu0 0
        %514 = vmatmul.mubr.bf16.gmra.mxu0 %v404
        %v515 = vpop.f32.mrf.mxu0
        %v516 = vadd.f32 %v370, %v515
        %v517 = vpop.f32.mrf.mxu0
        %v518 = vpop.f32.mrf.mxu0
        %v519 = vadd.f32 %v370, %v518
        %v520 = vpop.f32.mrf.mxu0
        %521 = vmatprep.mubr.bf16.mxu0 0
        %522 = vmatmul.mubr.bf16.gmra.mxu0 %v407
        %v523 = vpop.f32.mrf.mxu0
        %v524 = vadd.f32 %v370, %v523
        %v525 = vpop.f32.mrf.mxu0
        %v526 = vpop.f32.mrf.mxu0
        %v527 = vadd.f32 %v370, %v526
        %v528 = vpop.f32.mrf.mxu0
        %529 = vmatprep.mubr.bf16.mxu0 0
        %530 = vmatmul.mubr.bf16.gmra.mxu0 %v410
        %v531 = vpop.f32.mrf.mxu0
        %v532 = vadd.f32 %v370, %v531
        %v533 = vpop.f32.mrf.mxu0
        %v534 = vpop.f32.mrf.mxu0
        %v535 = vadd.f32 %v370, %v534
        %v536 = vpop.f32.mrf.mxu0
        %537 = vmatprep.mubr.bf16.mxu0 0
        %538 = vmatmul.mubr.bf16.gmra.mxu0 %v413
        %v539 = vpop.f32.mrf.mxu0
        %v540 = vadd.f32 %v370, %v539
        %v541 = vpop.f32.mrf.mxu0
        %v542 = vpop.f32.mrf.mxu0
        %v543 = vadd.f32 %v370, %v542
        %v544 = vpop.f32.mrf.mxu0
        %545 = vmatprep.mubr.bf16.mxu0 0
        %546 = vmatmul.mubr.bf16.gmra.mxu0 %v416
        %v547 = vpop.f32.mrf.mxu0
        %v548 = vadd.f32 %v370, %v547
        %v549 = vpop.f32.mrf.mxu0
        %v550 = vpop.f32.mrf.mxu0
        %v551 = vadd.f32 %v370, %v550
        %v552 = vpop.f32.mrf.mxu0
        %553 = vmatprep.mubr.bf16.mxu0 0
        %554 = vmatmul.mubr.bf16.gmra.mxu0 %v419
        %v555 = vpop.f32.mrf.mxu0
        %v556 = vadd.f32 %v370, %v555
        %v557 = vpop.f32.mrf.mxu0
        %v558 = vpop.f32.mrf.mxu0
        %v559 = vadd.f32 %v370, %v558
        %v560 = vpop.f32.mrf.mxu0
        %561 = vmatprep.mubr.bf16.mxu0 0
        %562 = vmatmul.mubr.bf16.gmra.mxu0 %v422
        %v563 = vpop.f32.mrf.mxu0
        %v564 = vadd.f32 %v370, %v563
        %v565 = vpop.f32.mrf.mxu0
        %v566 = vpop.f32.mrf.mxu0
        %v567 = vadd.f32 %v370, %v566
        %v568 = vpop.f32.mrf.mxu0
        %569 = vmatprep.mubr.bf16.mxu0 0
        %570 = vmatmul.mubr.bf16.gmra.mxu0 %v425
        %v571 = vpop.f32.mrf.mxu0
        %v572 = vadd.f32 %v370, %v571
        %v573 = vpop.f32.mrf.mxu0
        %v574 = vpop.f32.mrf.mxu0
        %v575 = vadd.f32 %v370, %v574
        %v576 = vpop.f32.mrf.mxu0
        %577 = vmatprep.mubr.bf16.mxu0 0
        %578 = vmatmul.mubr.bf16.gmra.mxu0 %v428
        %v579 = vpop.f32.mrf.mxu0
        %v580 = vadd.f32 %v370, %v579
        %v581 = vpop.f32.mrf.mxu0
        %v582 = vpop.f32.mrf.mxu0
        %v583 = vadd.f32 %v370, %v582
        %v584 = vpop.f32.mrf.mxu0
        %585 = vmatprep.mubr.bf16.mxu0 0
        %586 = vmatmul.mubr.bf16.gmra.mxu0 %v431
        %v587 = vpop.f32.mrf.mxu0
        %v588 = vadd.f32 %v370, %v587
        %v589 = vpop.f32.mrf.mxu0
        %v590 = vpop.f32.mrf.mxu0
        %v591 = vadd.f32 %v370, %v590
        %v592 = vpop.f32.mrf.mxu0
        %593 = vdwg.mxu0
        %v594 = vld [vmem:[%s3] sm:$0xf]
        %v595 = vld [vmem:[%s3 + $0x4] sm:$0xf]
        %v596 = vld [vmem:[%s3 + $0x8] sm:$0xf]
        %v597 = vld [vmem:[%s3 + $0xc] sm:$0xf]
        %v598 = vld [vmem:[%s3 + $0x10] sm:$0xf]
        %v599 = vld [vmem:[%s3 + $0x14] sm:$0xf]
        %v600 = vld [vmem:[%s3 + $0x18] sm:$0xf]
        %v601 = vld [vmem:[%s3 + $0x1c] sm:$0xf]
        %v602 = vld [vmem:[%s3 + $0x20] sm:$0xf]
        %v603 = vld [vmem:[%s3 + $0x24] sm:$0xf]
        %v604 = vld [vmem:[%s3 + $0x28] sm:$0xf]
        %v605 = vld [vmem:[%s3 + $0x2c] sm:$0xf]
        %v606 = vld [vmem:[%s3 + $0x30] sm:$0xf]
        %v607 = vld [vmem:[%s3 + $0x34] sm:$0xf]
        %v608 = vld [vmem:[%s3 + $0x38] sm:$0xf]
        %v609 = vld [vmem:[%s3 + $0x3c] sm:$0xf]
        %v610 = vld [vmem:[%s4] sm:$0x1]
        %v611 = vtanh.pop %v468
        %v612 = vtanh.pop %v471
        %v613 = vtanh.pop %v476
        %v614 = vtanh.pop %v479
        %v615 = vtanh.pop %v484
        %v616 = vtanh.pop %v487
        %v617 = vtanh.pop %v492
        %v618 = vtanh.pop %v495
        %v619 = vtanh.pop %v500
        %v620 = vtanh.pop %v503
        %v621 = vtanh.pop %v508
        %v622 = vtanh.pop %v511
        %v623 = vtanh.pop %v516
        %v624 = vtanh.pop %v519
        %v625 = vtanh.pop %v524
        %v626 = vtanh.pop %v527
        %v627 = vtanh.pop %v532
        %v628 = vtanh.pop %v535
        %v629 = vtanh.pop %v540
        %v630 = vtanh.pop %v543
        %v631 = vtanh.pop %v548
        %v632 = vtanh.pop %v551
        %v633 = vtanh.pop %v556
        %v634 = vtanh.pop %v559
        %v635 = vtanh.pop %v564
        %v636 = vtanh.pop %v567
        %v637 = vtanh.pop %v572
        %v638 = vtanh.pop %v575
        %v639 = vtanh.pop %v580
        %v640 = vtanh.pop %v583
        %v641 = vtanh.pop %v588
        %v642 = vtanh.pop %v591
        %v643 = vpack.c.bf16 %v612, %v611
        %v644 = vpack.c.bf16 %v614, %v613
        %v645 = vpack.c.bf16 %v616, %v615
        %v646 = vpack.c.bf16 %v618, %v617
        %v647 = vpack.c.bf16 %v620, %v619
        %v648 = vpack.c.bf16 %v622, %v621
        %v649 = vpack.c.bf16 %v624, %v623
        %v650 = vpack.c.bf16 %v626, %v625
        %v651 = vpack.c.bf16 %v628, %v627
        %v652 = vpack.c.bf16 %v630, %v629
        %v653 = vpack.c.bf16 %v632, %v631
        %v654 = vpack.c.bf16 %v634, %v633
        %v655 = vpack.c.bf16 %v636, %v635
        %v656 = vpack.c.bf16 %v638, %v637
        %v657 = vpack.c.bf16 %v640, %v639
        %v658 = vpack.c.bf16 %v642, %v641
        %v660 = vlaneseq
        %v661 = vshrl.u32 %v660, 7
        %v662 = vsub.s32 0, %v661
        %v663 = vrot.slane %v610, %v662
        %v681 = vunpack.c.l.b16 %v594
        %v682 = vunpack.c.l.b16 %v595
        %v683 = vunpack.c.l.b16 %v596
        %v684 = vunpack.c.l.b16 %v597
        %v685 = vunpack.c.l.b16 %v598
        %v686 = vunpack.c.l.b16 %v599
        %v687 = vunpack.c.l.b16 %v600
        %v688 = vunpack.c.l.b16 %v601
        %v689 = vunpack.c.l.b16 %v602
        %v690 = vunpack.c.l.b16 %v603
        %v691 = vunpack.c.l.b16 %v604
        %v692 = vunpack.c.l.b16 %v605
        %v693 = vunpack.c.l.b16 %v606
        %v694 = vunpack.c.l.b16 %v607
        %v695 = vunpack.c.l.b16 %v608
        %v696 = vunpack.c.l.b16 %v609
        %v697 = vpack.c.b16 %v682, %v681
        %v698 = vpack.c.b16 %v684, %v683
        %v699 = vpack.c.b16 %v686, %v685
        %v700 = vpack.c.b16 %v688, %v687
        %v701 = vpack.c.b16 %v690, %v689
        %v702 = vpack.c.b16 %v692, %v691
        %v703 = vpack.c.b16 %v694, %v693
        %v704 = vpack.c.b16 %v696, %v695
        %713 = vmatprep.subr.bf16.mxu0 0
        %714 = vmatpush1.bf16.msra.mxu0 %v704
        %715 = vmatprep.subr.bf16.mxu0 0
        %716 = vmatpush1.bf16.msra.mxu0 %v703
        %717 = vmatprep.subr.bf16.mxu0 0
        %718 = vmatpush1.bf16.msra.mxu0 %v702
        %719 = vmatprep.subr.bf16.mxu0 0
        %720 = vmatpush1.bf16.msra.mxu0 %v701
        %721 = vmatprep.subr.bf16.mxu0 0
        %722 = vmatpush1.bf16.msra.mxu0 %v700
        %723 = vmatprep.subr.bf16.mxu0 0
        %724 = vmatpush1.bf16.msra.mxu0 %v699
        %725 = vmatprep.subr.bf16.mxu0 0
        %726 = vmatpush1.bf16.msra.mxu0 %v698
        %727 = vmatprep.subr.bf16.mxu0 0
        %728 = vmatpush1.bf16.msra.mxu0 %v697
        %729 = vmatprep.subr.bf16.mxu0 0
        %730 = vmatpush2.bf16.msra.mxu0 0
        %731 = vmatprep.subr.bf16.mxu0 0
        %732 = vmatpush2.bf16.msra.mxu0 0
        %733 = vmatprep.subr.bf16.mxu0 0
        %734 = vmatpush2.bf16.msra.mxu0 0
        %735 = vmatprep.subr.bf16.mxu0 0
        %736 = vmatpush2.bf16.msra.mxu0 0
        %737 = vmatprep.subr.bf16.mxu0 0
        %738 = vmatpush2.bf16.msra.mxu0 0
        %739 = vmatprep.subr.bf16.mxu0 0
        %740 = vmatpush2.bf16.msra.mxu0 0
        %741 = vmatprep.subr.bf16.mxu0 0
        %742 = vmatpush2.bf16.msra.mxu0 0
        %743 = vmatprep.subr.bf16.mxu0 0
        %744 = vmatpush2.bf16.msra.mxu0 0
        %745 = vmatprep.mubr.bf16.mxu0 0
        %746 = vmatmul.mubr.bf16.gmra.mxu0 %v643
        %v747 = vpop.f32.mrf.mxu0
        %v748 = vadd.f32 %v663, %v747
        %v749 = vpop.f32.mrf.mxu0
        %v750 = vpop.f32.mrf.mxu0
        %v751 = vadd.f32 %v663, %v750
        %v752 = vpop.f32.mrf.mxu0
        %753 = vmatprep.mubr.bf16.mxu0 0
        %754 = vmatmul.mubr.bf16.gmra.mxu0 %v644
        %v755 = vpop.f32.mrf.mxu0
        %v756 = vadd.f32 %v663, %v755
        %v757 = vpop.f32.mrf.mxu0
        %v758 = vpop.f32.mrf.mxu0
        %v759 = vadd.f32 %v663, %v758
        %v760 = vpop.f32.mrf.mxu0
        %761 = vmatprep.mubr.bf16.mxu0 0
        %762 = vmatmul.mubr.bf16.gmra.mxu0 %v645
        %v763 = vpop.f32.mrf.mxu0
        %v764 = vadd.f32 %v663, %v763
        %v765 = vpop.f32.mrf.mxu0
        %v766 = vpop.f32.mrf.mxu0
        %v767 = vadd.f32 %v663, %v766
        %v768 = vpop.f32.mrf.mxu0
        %769 = vmatprep.mubr.bf16.mxu0 0
        %770 = vmatmul.mubr.bf16.gmra.mxu0 %v646
        %v771 = vpop.f32.mrf.mxu0
        %v772 = vadd.f32 %v663, %v771
        %v773 = vpop.f32.mrf.mxu0
        %v774 = vpop.f32.mrf.mxu0
        %v775 = vadd.f32 %v663, %v774
        %v776 = vpop.f32.mrf.mxu0
        %777 = vmatprep.mubr.bf16.mxu0 0
        %778 = vmatmul.mubr.bf16.gmra.mxu0 %v647
        %v779 = vpop.f32.mrf.mxu0
        %v780 = vadd.f32 %v663, %v779
        %v781 = vpop.f32.mrf.mxu0
        %v782 = vpop.f32.mrf.mxu0
        %v783 = vadd.f32 %v663, %v782
        %v784 = vpop.f32.mrf.mxu0
        %785 = vmatprep.mubr.bf16.mxu0 0
        %786 = vmatmul.mubr.bf16.gmra.mxu0 %v648
        %v787 = vpop.f32.mrf.mxu0
        %v788 = vadd.f32 %v663, %v787
        %v789 = vpop.f32.mrf.mxu0
        %v790 = vpop.f32.mrf.mxu0
        %v791 = vadd.f32 %v663, %v790
        %v792 = vpop.f32.mrf.mxu0
        %793 = vmatprep.mubr.bf16.mxu0 0
        %794 = vmatmul.mubr.bf16.gmra.mxu0 %v649
        %v795 = vpop.f32.mrf.mxu0
        %v796 = vadd.f32 %v663, %v795
        %v797 = vpop.f32.mrf.mxu0
        %v798 = vpop.f32.mrf.mxu0
        %v799 = vadd.f32 %v663, %v798
        %v800 = vpop.f32.mrf.mxu0
        %801 = vmatprep.mubr.bf16.mxu0 0
        %802 = vmatmul.mubr.bf16.gmra.mxu0 %v650
        %v803 = vpop.f32.mrf.mxu0
        %v804 = vadd.f32 %v663, %v803
        %v805 = vpop.f32.mrf.mxu0
        %v806 = vpop.f32.mrf.mxu0
        %v807 = vadd.f32 %v663, %v806
        %v808 = vpop.f32.mrf.mxu0
        %809 = vmatprep.mubr.bf16.mxu0 0
        %810 = vmatmul.mubr.bf16.gmra.mxu0 %v651
        %v811 = vpop.f32.mrf.mxu0
        %v812 = vadd.f32 %v663, %v811
        %v813 = vpop.f32.mrf.mxu0
        %v814 = vpop.f32.mrf.mxu0
        %v815 = vadd.f32 %v663, %v814
        %v816 = vpop.f32.mrf.mxu0
        %817 = vmatprep.mubr.bf16.mxu0 0
        %818 = vmatmul.mubr.bf16.gmra.mxu0 %v652
        %v819 = vpop.f32.mrf.mxu0
        %v820 = vadd.f32 %v663, %v819
        %v821 = vpop.f32.mrf.mxu0
        %v822 = vpop.f32.mrf.mxu0
        %v823 = vadd.f32 %v663, %v822
        %v824 = vpop.f32.mrf.mxu0
        %825 = vmatprep.mubr.bf16.mxu0 0
        %826 = vmatmul.mubr.bf16.gmra.mxu0 %v653
        %v827 = vpop.f32.mrf.mxu0
        %v828 = vadd.f32 %v663, %v827
        %v829 = vpop.f32.mrf.mxu0
        %v830 = vpop.f32.mrf.mxu0
        %v831 = vadd.f32 %v663, %v830
        %v832 = vpop.f32.mrf.mxu0
        %833 = vmatprep.mubr.bf16.mxu0 0
        %834 = vmatmul.mubr.bf16.gmra.mxu0 %v654
        %v835 = vpop.f32.mrf.mxu0
        %v836 = vadd.f32 %v663, %v835
        %v837 = vpop.f32.mrf.mxu0
        %v838 = vpop.f32.mrf.mxu0
        %v839 = vadd.f32 %v663, %v838
        %v840 = vpop.f32.mrf.mxu0
        %841 = vmatprep.mubr.bf16.mxu0 0
        %842 = vmatmul.mubr.bf16.gmra.mxu0 %v655
        %v843 = vpop.f32.mrf.mxu0
        %v844 = vadd.f32 %v663, %v843
        %v845 = vpop.f32.mrf.mxu0
        %v846 = vpop.f32.mrf.mxu0
        %v847 = vadd.f32 %v663, %v846
        %v848 = vpop.f32.mrf.mxu0
        %849 = vmatprep.mubr.bf16.mxu0 0
        %850 = vmatmul.mubr.bf16.gmra.mxu0 %v656
        %v851 = vpop.f32.mrf.mxu0
        %v852 = vadd.f32 %v663, %v851
        %v853 = vpop.f32.mrf.mxu0
        %v854 = vpop.f32.mrf.mxu0
        %v855 = vadd.f32 %v663, %v854
        %v856 = vpop.f32.mrf.mxu0
        %857 = vmatprep.mubr.bf16.mxu0 0
        %858 = vmatmul.mubr.bf16.gmra.mxu0 %v657
        %v859 = vpop.f32.mrf.mxu0
        %v860 = vadd.f32 %v663, %v859
        %v861 = vpop.f32.mrf.mxu0
        %v862 = vpop.f32.mrf.mxu0
        %v863 = vadd.f32 %v663, %v862
        %v864 = vpop.f32.mrf.mxu0
        %865 = vmatprep.mubr.bf16.mxu0 0
        %866 = vmatmul.mubr.bf16.gmra.mxu0 %v658
        %v867 = vpop.f32.mrf.mxu0
        %v868 = vadd.f32 %v663, %v867
        %v869 = vpop.f32.mrf.mxu0
        %v870 = vpop.f32.mrf.mxu0
        %v871 = vadd.f32 %v663, %v870
        %v872 = vpop.f32.mrf.mxu0
        %873 = vdwg.mxu0
        %v874 = vld [vmem:[%s5] sm:$0xf]
        %v875 = vld [vmem:[%s5 + $0x4] sm:$0xf]
        %v876 = vld [vmem:[%s5 + $0x8] sm:$0xf]
        %v877 = vld [vmem:[%s5 + $0xc] sm:$0xf]
        %v878 = vld [vmem:[%s5 + $0x10] sm:$0xf]
        %v879 = vld [vmem:[%s5 + $0x14] sm:$0xf]
        %v880 = vld [vmem:[%s5 + $0x18] sm:$0xf]
        %v881 = vld [vmem:[%s5 + $0x1c] sm:$0xf]
        %v882 = vld [vmem:[%s5 + $0x20] sm:$0xf]
        %v883 = vld [vmem:[%s5 + $0x24] sm:$0xf]
        %v884 = vld [vmem:[%s5 + $0x28] sm:$0xf]
        %v885 = vld [vmem:[%s5 + $0x2c] sm:$0xf]
        %v886 = vld [vmem:[%s5 + $0x30] sm:$0xf]
        %v887 = vld [vmem:[%s5 + $0x34] sm:$0xf]
        %v888 = vld [vmem:[%s5 + $0x38] sm:$0xf]
        %v889 = vld [vmem:[%s5 + $0x3c] sm:$0xf]
        %v890 = vld [vmem:[%s6] sm:$0x1]
        %v891 = vtanh.pop %v748
        %v892 = vtanh.pop %v751
        %v893 = vtanh.pop %v756
        %v894 = vtanh.pop %v759
        %v895 = vtanh.pop %v764
        %v896 = vtanh.pop %v767
        %v897 = vtanh.pop %v772
        %v898 = vtanh.pop %v775
        %v899 = vtanh.pop %v780
        %v900 = vtanh.pop %v783
        %v901 = vtanh.pop %v788
        %v902 = vtanh.pop %v791
        %v903 = vtanh.pop %v796
        %v904 = vtanh.pop %v799
        %v905 = vtanh.pop %v804
        %v906 = vtanh.pop %v807
        %v907 = vtanh.pop %v812
        %v908 = vtanh.pop %v815
        %v909 = vtanh.pop %v820
        %v910 = vtanh.pop %v823
        %v911 = vtanh.pop %v828
        %v912 = vtanh.pop %v831
        %v913 = vtanh.pop %v836
        %v914 = vtanh.pop %v839
        %v915 = vtanh.pop %v844
        %v916 = vtanh.pop %v847
        %v917 = vtanh.pop %v852
        %v918 = vtanh.pop %v855
        %v919 = vtanh.pop %v860
        %v920 = vtanh.pop %v863
        %v921 = vtanh.pop %v868
        %v922 = vtanh.pop %v871
        %v923 = vpack.c.bf16 %v892, %v891
        %v924 = vpack.c.bf16 %v894, %v893
        %v925 = vpack.c.bf16 %v896, %v895
        %v926 = vpack.c.bf16 %v898, %v897
        %v927 = vpack.c.bf16 %v900, %v899
        %v928 = vpack.c.bf16 %v902, %v901
        %v929 = vpack.c.bf16 %v904, %v903
        %v930 = vpack.c.bf16 %v906, %v905
        %v931 = vpack.c.bf16 %v908, %v907
        %v932 = vpack.c.bf16 %v910, %v909
        %v933 = vpack.c.bf16 %v912, %v911
        %v934 = vpack.c.bf16 %v914, %v913
        %v935 = vpack.c.bf16 %v916, %v915
        %v936 = vpack.c.bf16 %v918, %v917
        %v937 = vpack.c.bf16 %v920, %v919
        %v938 = vpack.c.bf16 %v922, %v921
        %v940 = vlaneseq
        %v941 = vshrl.u32 %v940, 7
        %v942 = vsub.s32 0, %v941
        %v943 = vrot.slane %v890, %v942
        %v961 = vunpack.c.l.b16 %v874
        %v962 = vunpack.c.l.b16 %v875
        %v963 = vunpack.c.l.b16 %v876
        %v964 = vunpack.c.l.b16 %v877
        %v965 = vunpack.c.l.b16 %v878
        %v966 = vunpack.c.l.b16 %v879
        %v967 = vunpack.c.l.b16 %v880
        %v968 = vunpack.c.l.b16 %v881
        %v969 = vunpack.c.l.b16 %v882
        %v970 = vunpack.c.l.b16 %v883
        %v971 = vunpack.c.l.b16 %v884
        %v972 = vunpack.c.l.b16 %v885
        %v973 = vunpack.c.l.b16 %v886
        %v974 = vunpack.c.l.b16 %v887
        %v975 = vunpack.c.l.b16 %v888
        %v976 = vunpack.c.l.b16 %v889
        %v977 = vpack.c.b16 %v962, %v961
        %v978 = vpack.c.b16 %v964, %v963
        %v979 = vpack.c.b16 %v966, %v965
        %v980 = vpack.c.b16 %v968, %v967
        %v981 = vpack.c.b16 %v970, %v969
        %v982 = vpack.c.b16 %v972, %v971
        %v983 = vpack.c.b16 %v974, %v973
        %v984 = vpack.c.b16 %v976, %v975
        %993 = vmatprep.subr.bf16.mxu0 0
        %994 = vmatpush1.bf16.msra.mxu0 %v984
        %995 = vmatprep.subr.bf16.mxu0 0
        %996 = vmatpush1.bf16.msra.mxu0 %v983
        %997 = vmatprep.subr.bf16.mxu0 0
        %998 = vmatpush1.bf16.msra.mxu0 %v982
        %999 = vmatprep.subr.bf16.mxu0 0
        %1000 = vmatpush1.bf16.msra.mxu0 %v981
        %1001 = vmatprep.subr.bf16.mxu0 0
        %1002 = vmatpush1.bf16.msra.mxu0 %v980
        %1003 = vmatprep.subr.bf16.mxu0 0
        %1004 = vmatpush1.bf16.msra.mxu0 %v979
        %1005 = vmatprep.subr.bf16.mxu0 0
        %1006 = vmatpush1.bf16.msra.mxu0 %v978
        %1007 = vmatprep.subr.bf16.mxu0 0
        %1008 = vmatpush1.bf16.msra.mxu0 %v977
        %1009 = vmatprep.subr.bf16.mxu0 0
        %1010 = vmatpush2.bf16.msra.mxu0 0
        %1011 = vmatprep.subr.bf16.mxu0 0
        %1012 = vmatpush2.bf16.msra.mxu0 0
        %1013 = vmatprep.subr.bf16.mxu0 0
        %1014 = vmatpush2.bf16.msra.mxu0 0
        %1015 = vmatprep.subr.bf16.mxu0 0
        %1016 = vmatpush2.bf16.msra.mxu0 0
        %1017 = vmatprep.subr.bf16.mxu0 0
        %1018 = vmatpush2.bf16.msra.mxu0 0
        %1019 = vmatprep.subr.bf16.mxu0 0
        %1020 = vmatpush2.bf16.msra.mxu0 0
        %1021 = vmatprep.subr.bf16.mxu0 0
        %1022 = vmatpush2.bf16.msra.mxu0 0
        %1023 = vmatprep.subr.bf16.mxu0 0
        %1024 = vmatpush2.bf16.msra.mxu0 0
        %1025 = vmatprep.mubr.bf16.mxu0 0
        %1026 = vmatmul.mubr.bf16.gmra.mxu0 %v923
        %v1027 = vpop.f32.mrf.mxu0
        %v1028 = vadd.f32 %v943, %v1027
        %v1029 = vpop.f32.mrf.mxu0
        %v1030 = vpop.f32.mrf.mxu0
        %v1031 = vadd.f32 %v943, %v1030
        %v1032 = vpop.f32.mrf.mxu0
        %1033 = vmatprep.mubr.bf16.mxu0 0
        %1034 = vmatmul.mubr.bf16.gmra.mxu0 %v924
        %v1035 = vpop.f32.mrf.mxu0
        %v1036 = vadd.f32 %v943, %v1035
        %v1037 = vpop.f32.mrf.mxu0
        %v1038 = vpop.f32.mrf.mxu0
        %v1039 = vadd.f32 %v943, %v1038
        %v1040 = vpop.f32.mrf.mxu0
        %1041 = vmatprep.mubr.bf16.mxu0 0
        %1042 = vmatmul.mubr.bf16.gmra.mxu0 %v925
        %v1043 = vpop.f32.mrf.mxu0
        %v1044 = vadd.f32 %v943, %v1043
        %v1045 = vpop.f32.mrf.mxu0
        %v1046 = vpop.f32.mrf.mxu0
        %v1047 = vadd.f32 %v943, %v1046
        %v1048 = vpop.f32.mrf.mxu0
        %1049 = vmatprep.mubr.bf16.mxu0 0
        %1050 = vmatmul.mubr.bf16.gmra.mxu0 %v926
        %v1051 = vpop.f32.mrf.mxu0
        %v1052 = vadd.f32 %v943, %v1051
        %v1053 = vpop.f32.mrf.mxu0
        %v1054 = vpop.f32.mrf.mxu0
        %v1055 = vadd.f32 %v943, %v1054
        %v1056 = vpop.f32.mrf.mxu0
        %1057 = vmatprep.mubr.bf16.mxu0 0
        %1058 = vmatmul.mubr.bf16.gmra.mxu0 %v927
        %v1059 = vpop.f32.mrf.mxu0
        %v1060 = vadd.f32 %v943, %v1059
        %v1061 = vpop.f32.mrf.mxu0
        %v1062 = vpop.f32.mrf.mxu0
        %v1063 = vadd.f32 %v943, %v1062
        %v1064 = vpop.f32.mrf.mxu0
        %1065 = vmatprep.mubr.bf16.mxu0 0
        %1066 = vmatmul.mubr.bf16.gmra.mxu0 %v928
        %v1067 = vpop.f32.mrf.mxu0
        %v1068 = vadd.f32 %v943, %v1067
        %v1069 = vpop.f32.mrf.mxu0
        %v1070 = vpop.f32.mrf.mxu0
        %v1071 = vadd.f32 %v943, %v1070
        %v1072 = vpop.f32.mrf.mxu0
        %1073 = vmatprep.mubr.bf16.mxu0 0
        %1074 = vmatmul.mubr.bf16.gmra.mxu0 %v929
        %v1075 = vpop.f32.mrf.mxu0
        %v1076 = vadd.f32 %v943, %v1075
        %v1077 = vpop.f32.mrf.mxu0
        %v1078 = vpop.f32.mrf.mxu0
        %v1079 = vadd.f32 %v943, %v1078
        %v1080 = vpop.f32.mrf.mxu0
        %1081 = vmatprep.mubr.bf16.mxu0 0
        %1082 = vmatmul.mubr.bf16.gmra.mxu0 %v930
        %v1083 = vpop.f32.mrf.mxu0
        %v1084 = vadd.f32 %v943, %v1083
        %v1085 = vpop.f32.mrf.mxu0
        %v1086 = vpop.f32.mrf.mxu0
        %v1087 = vadd.f32 %v943, %v1086
        %v1088 = vpop.f32.mrf.mxu0
        %1089 = vmatprep.mubr.bf16.mxu0 0
        %1090 = vmatmul.mubr.bf16.gmra.mxu0 %v931
        %v1091 = vpop.f32.mrf.mxu0
        %v1092 = vadd.f32 %v943, %v1091
        %v1093 = vpop.f32.mrf.mxu0
        %v1094 = vpop.f32.mrf.mxu0
        %v1095 = vadd.f32 %v943, %v1094
        %v1096 = vpop.f32.mrf.mxu0
        %1097 = vmatprep.mubr.bf16.mxu0 0
        %1098 = vmatmul.mubr.bf16.gmra.mxu0 %v932
        %v1099 = vpop.f32.mrf.mxu0
        %v1100 = vadd.f32 %v943, %v1099
        %v1101 = vpop.f32.mrf.mxu0
        %v1102 = vpop.f32.mrf.mxu0
        %v1103 = vadd.f32 %v943, %v1102
        %v1104 = vpop.f32.mrf.mxu0
        %1105 = vmatprep.mubr.bf16.mxu0 0
        %1106 = vmatmul.mubr.bf16.gmra.mxu0 %v933
        %v1107 = vpop.f32.mrf.mxu0
        %v1108 = vadd.f32 %v943, %v1107
        %v1109 = vpop.f32.mrf.mxu0
        %v1110 = vpop.f32.mrf.mxu0
        %v1111 = vadd.f32 %v943, %v1110
        %v1112 = vpop.f32.mrf.mxu0
        %1113 = vmatprep.mubr.bf16.mxu0 0
        %1114 = vmatmul.mubr.bf16.gmra.mxu0 %v934
        %v1115 = vpop.f32.mrf.mxu0
        %v1116 = vadd.f32 %v943, %v1115
        %v1117 = vpop.f32.mrf.mxu0
        %v1118 = vpop.f32.mrf.mxu0
        %v1119 = vadd.f32 %v943, %v1118
        %v1120 = vpop.f32.mrf.mxu0
        %1121 = vmatprep.mubr.bf16.mxu0 0
        %1122 = vmatmul.mubr.bf16.gmra.mxu0 %v935
        %v1123 = vpop.f32.mrf.mxu0
        %v1124 = vadd.f32 %v943, %v1123
        %v1125 = vpop.f32.mrf.mxu0
        %v1126 = vpop.f32.mrf.mxu0
        %v1127 = vadd.f32 %v943, %v1126
        %v1128 = vpop.f32.mrf.mxu0
        %1129 = vmatprep.mubr.bf16.mxu0 0
        %1130 = vmatmul.mubr.bf16.gmra.mxu0 %v936
        %v1131 = vpop.f32.mrf.mxu0
        %v1132 = vadd.f32 %v943, %v1131
        %v1133 = vpop.f32.mrf.mxu0
        %v1134 = vpop.f32.mrf.mxu0
        %v1135 = vadd.f32 %v943, %v1134
        %v1136 = vpop.f32.mrf.mxu0
        %1137 = vmatprep.mubr.bf16.mxu0 0
        %1138 = vmatmul.mubr.bf16.gmra.mxu0 %v937
        %v1139 = vpop.f32.mrf.mxu0
        %v1140 = vadd.f32 %v943, %v1139
        %v1141 = vpop.f32.mrf.mxu0
        %v1142 = vpop.f32.mrf.mxu0
        %v1143 = vadd.f32 %v943, %v1142
        %v1144 = vpop.f32.mrf.mxu0
        %1145 = vmatprep.mubr.bf16.mxu0 0
        %1146 = vmatmul.mubr.bf16.gmra.mxu0 %v938
        %v1147 = vpop.f32.mrf.mxu0
        %v1148 = vadd.f32 %v943, %v1147
        %v1149 = vpop.f32.mrf.mxu0
        %v1150 = vpop.f32.mrf.mxu0
        %v1151 = vadd.f32 %v943, %v1150
        %v1152 = vpop.f32.mrf.mxu0
        %1153 = vdwg.mxu0
        %1154 = vst [vmem:[%s272] sm:$0xff] %v1028
        %1155 = vst [vmem:[%s272 + $0x8] sm:$0xff] %v1031
        %1156 = vst [vmem:[%s272 + $0x10] sm:$0xff] %v1036
        %1157 = vst [vmem:[%s272 + $0x18] sm:$0xff] %v1039
        %1158 = vst [vmem:[%s272 + $0x20] sm:$0xff] %v1044
        %1159 = vst [vmem:[%s272 + $0x28] sm:$0xff] %v1047
        %1160 = vst [vmem:[%s272 + $0x30] sm:$0xff] %v1052
        %1161 = vst [vmem:[%s272 + $0x38] sm:$0xff] %v1055
        %1162 = vst [vmem:[%s272 + $0x40] sm:$0xff] %v1060
        %1163 = vst [vmem:[%s272 + $0x48] sm:$0xff] %v1063
        %1164 = vst [vmem:[%s272 + $0x50] sm:$0xff] %v1068
        %1165 = vst [vmem:[%s272 + $0x58] sm:$0xff] %v1071
        %1166 = vst [vmem:[%s272 + $0x60] sm:$0xff] %v1076
        %1167 = vst [vmem:[%s272 + $0x68] sm:$0xff] %v1079
        %1168 = vst [vmem:[%s272 + $0x70] sm:$0xff] %v1084
        %1169 = vst [vmem:[%s272 + $0x78] sm:$0xff] %v1087
        %1170 = vst [vmem:[%s272 + $0x80] sm:$0xff] %v1092
        %1171 = vst [vmem:[%s272 + $0x88] sm:$0xff] %v1095
        %1172 = vst [vmem:[%s272 + $0x90] sm:$0xff] %v1100
        %1173 = vst [vmem:[%s272 + $0x98] sm:$0xff] %v1103
        %1174 = vst [vmem:[%s272 + $0xa0] sm:$0xff] %v1108
        %1175 = vst [vmem:[%s272 + $0xa8] sm:$0xff] %v1111
        %1176 = vst [vmem:[%s272 + $0xb0] sm:$0xff] %v1116
        %1177 = vst [vmem:[%s272 + $0xb8] sm:$0xff] %v1119
        %1178 = vst [vmem:[%s272 + $0xc0] sm:$0xff] %v1124
        %1179 = vst [vmem:[%s272 + $0xc8] sm:$0xff] %v1127
        %1180 = vst [vmem:[%s272 + $0xd0] sm:$0xff] %v1132
        %1181 = vst [vmem:[%s272 + $0xd8] sm:$0xff] %v1135
        %1182 = vst [vmem:[%s272 + $0xe0] sm:$0xff] %v1140
        %1183 = vst [vmem:[%s272 + $0xe8] sm:$0xff] %v1143
        %1184 = vst [vmem:[%s272 + $0xf0] sm:$0xff] %v1148
        %1185 = vst [vmem:[%s272 + $0xf8] sm:$0xff] %v1151
        %s1186 = sand.u32 %s181, 1
        %s1187 = scalar_lea.sflag [#allocation3], %s1186
        %s1188 = sand.u32 %s181, 1
        %s1189 = smul.addr %s1188, 256
        %s1190 = scalar_lea.vmem [#allocation2], %s1189
        // Predicated region
        $region49: #{tpu_custom_call.1} parent=47 // pred_check
          %p1191 = pneg %p191
        $region50: #{tpu_custom_call.1} parent=47 // pred_check_branch
          %1193 = sbr.rel (%p1191) target = $region52
        $region51: #{tpu_custom_call.1} parent=47 // pred_region
          %s1194 = smul.u32 32, %s21
          %s1196 = ssub.s32 4096, 4096
          %1197 = vsyncadd %s1187, %s1196
          %s1198 = smul.addr %s1194, 128
          %s1199 = scalar_lea.hbm %s7, %s1198
          %s1200 = sshll.u32 %s1190, 4
          %s1201 = int_to_ptr.vmem [resolvable:$true] %s1200
          %1206 = dma.vmem_to_hbm [thread:$0]  %s1201, 4096, %s1199, %s1187, 128, 128, 8
        $region52: #{tpu_custom_call.1} parent=47 // pred_fallthru
          _
      $region48: #{tpu_custom_call.1} parent=5 // pred_fallthru
        _
      %p1207 = scmp.le.s32.totalorder 2, %s16
      // Predicated region
      $region53: #{tpu_custom_call.1} parent=5 // pred_check
        %p1208 = pneg %p1207
      $region54: #{tpu_custom_call.1} parent=5 // pred_check_branch
        %1210 = sbr.rel (%p1208) target = $region56
      $region55: #{tpu_custom_call.1} parent=5 // pred_region
        %s1211 = ssub.s32 %s16, 2
        // Predicated region
        $region57: #{tpu_custom_call.1} parent=55 // pred_check
          %p1212 = pneg %p197
        $region58: #{tpu_custom_call.1} parent=55 // pred_check_branch
          %1214 = sbr.rel (%p1212) target = $region60
        $region59: #{tpu_custom_call.1} parent=55 // pred_region
          %s1215 = sand.u32 %s182, 1
          %s1216 = scalar_lea.sflag [#allocation3], %s1215
          %s1217 = sand.u32 %s182, 1
          %s1218 = smul.addr %s1217, 256
          %s1219 = scalar_lea.vmem [#allocation2], %s1218
          %1220 = dma.done %s1216, 4096
        $region60: #{tpu_custom_call.1} parent=55 // pred_fallthru
          _
      $region56: #{tpu_custom_call.1} parent=5 // pred_fallthru
        _
    $region6: #{tpu_custom_call.1} parent=1 // loop_footer
      %s20 = sadd.s32 1, %s16
    $region7: #{tpu_custom_call.1} parent=1 // loop_footer_branch
      %15 = sbr.rel target = $region3
    $region8: #{tpu_custom_call.1} parent=1 // loop_exit
      _
    %1221 = vsyncpa [#allocation3], 1
    %s1222 = scalar_lea.sflag [#allocation3], 1
    %1223 = vsyncpa %s1222, 1

</llo_original>
